<compile_context>
chip_gen: v7x
topology: tpu7x:2x2x1
jax: 0.10.0
libtpu: 0.0.40
codegen_flags: <defaults>
</compile_context>

<pallas_src>
import math

import jax
import jax.numpy as jnp
from jax.experimental import pallas as pl
from jax.experimental.pallas import tpu as pltpu

LANE = 128          # vreg lane width
NEG_BIG = -1.0e30   # finite "-inf" bias for padded action columns


def _round_up(x, m):
    return ((x + m - 1) // m) * m


def policy_net_kernel(x_ref, w1_ref, b1_ref, w2_ref, b2_ref, out_ref):
    """One batch tile: softmax(relu(x @ W1 + b1) @ W2 + b2).

    All padded lanes are handled via the (pre-padded) weights/biases:
      * hidden pad columns of W1/b1 are zero  -> relu(0) = 0 activations,
      * hidden pad rows of W2 are zero        -> contribute nothing,
      * action pad columns of b2 are NEG_BIG  -> exp underflows to 0,
    so no masking is needed inside the kernel.
    """
    x = x_ref[...]                                            # (TB, S)  f32

    # fc1 + ReLU  (MXU matmul, f32 accumulation)
    h = jnp.dot(x, w1_ref[...], preferred_element_type=jnp.float32) + b1_ref[...]
    h = jnp.maximum(h, 0.0)                                   # (TB, HPAD)

    # fc2 (action columns padded to a full lane row)
    logits = jnp.dot(h, w2_ref[...], preferred_element_type=jnp.float32) + b2_ref[...]

    # Numerically stable softmax along the action axis.
    m = jnp.max(logits, axis=1, keepdims=True)
    e = jnp.exp(logits - m)                                   # pad cols -> 0
    denom = jnp.sum(e, axis=1, keepdims=True)
    # Approx reciprocal on the EUP slot + one Newton step (on a (TB,1) column)
    # instead of a VPU divide sequence.
    r = pl.reciprocal(denom, approx=True)
    r = r * (2.0 - denom * r)
    out_ref[...] = (e * r).astype(out_ref.dtype)


def policy_net_forward(x, w1, b1, w2, b2, *, tile_batch=512):
    """x:(B,S), w1:(S,H), b1:(1,H)|(H,), w2:(H,A), b2:(1,A)|(A,) -> probs:(B,A)."""
    batch, state_dim = x.shape
    hidden_dim = w1.shape[1]
    action_num = w2.shape[1]
    f32 = jnp.float32

    # Lane-dense padding of the tiny parameter tensors (one-time wrapper cost).
    hpad = _round_up(max(hidden_dim, LANE), LANE)
    apad = _round_up(max(action_num, LANE), LANE)

    w1_p = jnp.pad(w1.astype(f32), ((0, 0), (0, hpad - hidden_dim)))
    b1_p = jnp.pad(b1.astype(f32).reshape(1, hidden_dim),
                   ((0, 0), (0, hpad - hidden_dim)))
    w2_p = jnp.pad(w2.astype(f32),
                   ((0, hpad - hidden_dim), (0, apad - action_num)))
    # Pad action columns of the bias with a huge negative value -> softmax 0.
    b2_p = jnp.pad(b2.astype(f32).reshape(1, action_num),
                   ((0, 0), (0, apad - action_num)),
                   constant_values=NEG_BIG)

    # Batch tiling: 1-D grid over batch, weights resident via constant index_map.
    tb = _round_up(min(tile_batch, max(batch, 1)), 8)
    padded_batch = _round_up(batch, tb)
    x_p = x.astype(f32)
    if padded_batch != batch:
        x_p = jnp.pad(x_p, ((0, padded_batch - batch), (0, 0)))
    grid = (padded_batch // tb,)

    out_padded = pl.pallas_call(
        policy_net_kernel,
        out_shape=jax.ShapeDtypeStruct((padded_batch, apad), f32),
        grid_spec=pltpu.PrefetchScalarGridSpec(
            num_scalar_prefetch=0,
            grid=grid,
            in_specs=[
                pl.BlockSpec((tb, state_dim), lambda i: (i, 0)),   # x: streamed
                pl.BlockSpec((state_dim, hpad), lambda i: (0, 0)),  # W1: resident
                pl.BlockSpec((1, hpad), lambda i: (0, 0)),          # b1: resident
                pl.BlockSpec((hpad, apad), lambda i: (0, 0)),       # W2: resident
                pl.BlockSpec((1, apad), lambda i: (0, 0)),          # b2: resident
            ],
            out_specs=pl.BlockSpec((tb, apad), lambda i: (i, 0)),
        ),
        compiler_params=pltpu.CompilerParams(
            dimension_semantics=("parallel",),  # shard batch tiles across TCs on v7x
        ),
    )(x_p, w1_p, b1_p, w2_p, b2_p)

    # Drop batch padding and the padded action columns.
    return out_padded[:batch, :action_num]


def init_policy_net_params(key, state_dim, action_num, hidden_dim):
    """Deterministic init mirroring nn.Linear's U(-1/sqrt(fan_in), 1/sqrt(fan_in))."""
    k1, k2, k3, k4 = jax.random.split(key, 4)
    bound1 = 1.0 / math.sqrt(state_dim)
    bound2 = 1.0 / math.sqrt(hidden_dim)
    # Stored already-transposed relative to PyTorch: (in, out).
    w1 = jax.random.uniform(k1, (state_dim, hidden_dim), jnp.float32, -bound1, bound1)
    b1 = jax.random.uniform(k2, (1, hidden_dim), jnp.float32, -bound1, bound1)
    w2 = jax.random.uniform(k3, (hidden_dim, action_num), jnp.float32, -bound2, bound2)
    b2 = jax.random.uniform(k4, (1, action_num), jnp.float32, -bound2, bound2)
    return w1, b1, w2, b2


if __name__ == "__main__":
    # Batch many "environment states" per call (the main amortization lever);
    # batch=250 is deliberately not a multiple of the 128-row tile so the
    # padding + 2-step grid path is exercised.  state_dim=16, hidden=32, actions=4.
    batch, state_dim, hidden_dim, action_num = 250, 16, 32, 4

    key = jax.random.PRNGKey(0)
    kx, kp = jax.random.split(key)
    x = jax.random.normal(kx, (batch, state_dim), jnp.float32)
    w1, b1, w2, b2 = init_policy_net_params(kp, state_dim, action_num, hidden_dim)

    probs = policy_net_forward(x, w1, b1, w2, b2, tile_batch=128)
    probs = jax.block_until_ready(probs)

    # Pure-JAX reference check (same math as the PyTorch forward).
    h_ref = jnp.maximum(x @ w1 + b1, 0.0)
    logits_ref = h_ref @ w2 + b2
    probs_ref = jax.nn.softmax(logits_ref, axis=1)

    assert probs.shape == (batch, action_num)
    # 1e-4 tolerance leaves headroom for the approx-reciprocal (+ Newton step).
    assert jnp.allclose(probs, probs_ref, atol=1e-4, rtol=1e-4)
    assert jnp.allclose(jnp.sum(probs, axis=1), 1.0, atol=1e-4)

    print("KERNEL_OK")
</pallas_src>

<mosaic_0001>
module attributes {stable_mosaic.version = 11 : i64} {
  func.func @policy_net_kernel(%arg0: i32, %arg1: memref<128x16xf32, #tpu.memory_space<vmem>>, %arg2: memref<16x128xf32, #tpu.memory_space<vmem>>, %arg3: memref<1x128xf32, #tpu.memory_space<vmem>>, %arg4: memref<128x128xf32, #tpu.memory_space<vmem>>, %arg5: memref<1x128xf32, #tpu.memory_space<vmem>>, %arg6: memref<128x128xf32, #tpu.memory_space<vmem>>) attributes {dimension_semantics = [#tpu.dimension_semantics<parallel>], iteration_bounds = array<i64: 2>, scalar_prefetch = 0 : i64, scratch_operands = 0 : i64, tpu.core_type = #tpu.core_type<tc>, window_params = [{transform_indices = @transform_0, window_bounds = array<i64: 128, 16>}, {pipeline_mode = #tpu.pipeline_mode<synchronous>, transform_indices = @transform_1, window_bounds = array<i64: 16, 128>}, {pipeline_mode = #tpu.pipeline_mode<synchronous>, transform_indices = @transform_2, window_bounds = array<i64: 1, 128>}, {pipeline_mode = #tpu.pipeline_mode<synchronous>, transform_indices = @transform_3, window_bounds = array<i64: 128, 128>}, {pipeline_mode = #tpu.pipeline_mode<synchronous>, transform_indices = @transform_4, window_bounds = array<i64: 1, 128>}, {transform_indices = @transform_5, window_bounds = array<i64: 128, 128>}]} {
    %c0 = arith.constant 0 : index
    %c0_0 = arith.constant 0 : index
    %0 = vector.load %arg1[%c0, %c0_0] : memref<128x16xf32, #tpu.memory_space<vmem>>, vector<128x16xf32>
    %c0_1 = arith.constant 0 : index
    %c0_2 = arith.constant 0 : index
    %1 = vector.load %arg2[%c0_1, %c0_2] : memref<16x128xf32, #tpu.memory_space<vmem>>, vector<16x128xf32>
    %cst = arith.constant dense<0.000000e+00> : vector<128x128xf32>
    %2 = tpu.matmul %0, %1, %cst {dimension_numbers = #tpu.dot_dimension_numbers<[1], [0], [0], [1], [0, 0, 1, 1], [], []>} : vector<128x16xf32>, vector<16x128xf32>, vector<128x128xf32> -> vector<128x128xf32>
    %c0_3 = arith.constant 0 : index
    %c0_4 = arith.constant 0 : index
    %3 = vector.load %arg3[%c0_3, %c0_4] : memref<1x128xf32, #tpu.memory_space<vmem>>, vector<1x128xf32>
    %4 = vector.broadcast %3 : vector<1x128xf32> to vector<128x128xf32>
    %5 = arith.addf %2, %4 : vector<128x128xf32>
    %cst_5 = arith.constant 0.000000e+00 : f32
    %6 = vector.broadcast %cst_5 : f32 to vector<128x128xf32>
    %7 = arith.maximumf %5, %6 : vector<128x128xf32>
    %c0_6 = arith.constant 0 : index
    %c0_7 = arith.constant 0 : index
    %8 = vector.load %arg4[%c0_6, %c0_7] : memref<128x128xf32, #tpu.memory_space<vmem>>, vector<128x128xf32>
    %cst_8 = arith.constant dense<0.000000e+00> : vector<128x128xf32>
    %9 = tpu.matmul %7, %8, %cst_8 {dimension_numbers = #tpu.dot_dimension_numbers<[1], [0], [0], [1], [0, 0, 1, 1], [], []>} : vector<128x128xf32>, vector<128x128xf32>, vector<128x128xf32> -> vector<128x128xf32>
    %c0_9 = arith.constant 0 : index
    %c0_10 = arith.constant 0 : index
    %10 = vector.load %arg5[%c0_9, %c0_10] : memref<1x128xf32, #tpu.memory_space<vmem>>, vector<1x128xf32>
    %11 = vector.broadcast %10 : vector<1x128xf32> to vector<128x128xf32>
    %12 = arith.addf %9, %11 : vector<128x128xf32>
    %cst_11 = arith.constant dense<0xFF800000> : vector<128xf32>
    %13 = vector.multi_reduction <maximumf>, %12, %cst_11 [1] : vector<128x128xf32> to vector<128xf32>
    %14 = vector.shape_cast %13 : vector<128xf32> to vector<128x1xf32>
    %15 = vector.broadcast %14 : vector<128x1xf32> to vector<128x128xf32>
    %16 = arith.subf %12, %15 : vector<128x128xf32>
    %17 = math.exp %16 : vector<128x128xf32>
    %cst_12 = arith.constant dense<0.000000e+00> : vector<128xf32>
    %18 = vector.multi_reduction <add>, %17, %cst_12 [1] : vector<128x128xf32> to vector<128xf32>
    %19 = vector.shape_cast %18 : vector<128xf32> to vector<128x1xf32>
    %20 = tpu.reciprocal %19 {approx = true} : vector<128x1xf32> -> vector<128x1xf32>
    %21 = arith.mulf %19, %20 : vector<128x1xf32>
    %cst_13 = arith.constant 2.000000e+00 : f32
    %22 = vector.broadcast %cst_13 : f32 to vector<128x1xf32>
    %23 = arith.subf %22, %21 : vector<128x1xf32>
    %24 = arith.mulf %20, %23 : vector<128x1xf32>
    %25 = vector.broadcast %24 : vector<128x1xf32> to vector<128x128xf32>
    %26 = arith.mulf %17, %25 : vector<128x128xf32>
    %c0_14 = arith.constant 0 : index
    %c0_15 = arith.constant 0 : index
    %27 = vector.load %arg6[%c0_14, %c0_15] : memref<128x128xf32, #tpu.memory_space<vmem>>, vector<128x128xf32>
    tpu.vector_store %arg6[%c0_14, %c0_15], %26 {strides = array<i32>} : memref<128x128xf32, #tpu.memory_space<vmem>>, vector<128x128xf32>,
    return
  }
  func.func @transform_0(%arg0: i32) -> (i32, i32) {
    %c0_i32 = arith.constant 0 : i32
    %c0_i32_0 = arith.constant 0 : i32
    return %arg0, %c0_i32 : i32, i32
  }
  func.func @transform_1(%arg0: i32) -> (i32, i32) {
    %c0_i32 = arith.constant 0 : i32
    %c0_i32_0 = arith.constant 0 : i32
    %c0_i32_1 = arith.constant 0 : i32
    return %c0_i32, %c0_i32_0 : i32, i32
  }
  func.func @transform_2(%arg0: i32) -> (i32, i32) {
    %c0_i32 = arith.constant 0 : i32
    %c0_i32_0 = arith.constant 0 : i32
    %c0_i32_1 = arith.constant 0 : i32
    return %c0_i32, %c0_i32_0 : i32, i32
  }
  func.func @transform_3(%arg0: i32) -> (i32, i32) {
    %c0_i32 = arith.constant 0 : i32
    %c0_i32_0 = arith.constant 0 : i32
    %c0_i32_1 = arith.constant 0 : i32
    return %c0_i32, %c0_i32_0 : i32, i32
  }
  func.func @transform_4(%arg0: i32) -> (i32, i32) {
    %c0_i32 = arith.constant 0 : i32
    %c0_i32_0 = arith.constant 0 : i32
    %c0_i32_1 = arith.constant 0 : i32
    return %c0_i32, %c0_i32_0 : i32, i32
  }
  func.func @transform_5(%arg0: i32) -> (i32, i32) {
    %c0_i32 = arith.constant 0 : i32
    %c0_i32_0 = arith.constant 0 : i32
    return %arg0, %c0_i32 : i32, i32
  }
}

</mosaic_0001>

<llo_original>
// kernel: tpu_custom_call.1
$region0: #{tpu_custom_call.1}
  #allocation0 [shape = 'u32[]', space=smem, size = 0x4, offset = 0x4, fixed_abs, tag = 'smem constant byte address 0x4 - core index']
  #allocation1 [shape = 'u32[144,128]{1,0:T(1,128)}', space=vmem, size = 0x12000, scoped, tag = 'internal scratch']
  %s0 = inlined_call_operand.vmem [shape: f32[256,16], index: 0, kind: input, shape index: {}]
  %s1 = inlined_call_operand.vmem [shape: f32[16,128], index: 1, kind: input, shape index: {}]
  %s2 = inlined_call_operand.vmem [shape: f32[1,128], index: 2, kind: input, shape index: {}]
  %s3 = inlined_call_operand.vmem [shape: f32[128,128], index: 3, kind: input, shape index: {}]
  %s4 = inlined_call_operand.vmem [shape: f32[1,128], index: 4, kind: input, shape index: {}]
  %s5 = inlined_call_operand.hbm [shape: f32[256,128], index: 5, kind: output, shape index: {}]
  %s6 = sld [smem:[#allocation0]]
  $region53: #{tpu_custom_call.1} parent=0
    _
  %s8 = ssub.s32 1, %s6
  %s9 = scalar_select 0, %s8, %s6
  $region1: #{tpu_custom_call.1} parent=0
    #allocation2 [shape = 'u8[131072]{0}', space=vmem, size = 0x20000, scoped, tag = 'output window, operand 0']
    #allocation3 [shape = 's32[2]{0}', space=sflag, size = 0x8, scoped, tag = 'scoped memory for tpu_custom_call.1']
    %10 = vsyncpa [#allocation3], 0
    %s11 = scalar_lea.sflag [#allocation3], 1
    %12 = vsyncpa %s11, 0
    loop: start=0, step=1, limit=4
    $region2: #{tpu_custom_call.1} parent=1 // loop_pre_header
      _
    $region3: #{tpu_custom_call.1} parent=1 // loop_header
      %s14 = sphi 0, %s18
      %p15 = scmp.ge.s32.totalorder %s14, 4
      %s24 = sphi 0, %s26
      %s27 = sphi 0, %s24
      %s28 = sphi 0, %s27
      %s44 = sphi 0, %s28
      %s48 = sphi 0, %s48
      %s50 = sphi 0, %s48
      %s51 = sphi 0, %s50
      %s65 = sphi 0, %s51
      %s69 = sphi 0, %s69
      %s71 = sphi 0, %s69
      %s72 = sphi 0, %s71
      %s86 = sphi 0, %s72
      %s90 = sphi 0, %s90
      %s92 = sphi 0, %s90
      %s93 = sphi 0, %s92
      %s107 = sphi 0, %s93
      %s111 = sphi 0, %s111
      %s113 = sphi 0, %s111
      %s114 = sphi 0, %s113
      %s128 = sphi 0, %s114
      %s134 = sphi 0, %s136
      %s137 = sphi 0, %s134
      %s138 = sphi 0, %s137
      %s154 = sphi 0, %s138
    $region4: #{tpu_custom_call.1} parent=1 // loop_header_branch
      %17 = sbr.rel (%p15) target = $region8
    $region5: #{tpu_custom_call.1} parent=1 // loop_body
      %s19 = ssub.s32 %s14, 1
      %s20 = ssub.s32 %s14, 2
      %s21 = sadd.s32 %s14, 1
      %s22 = ssub.s32 %s14, %s21
      %p23 = scmp.eq.s32.totalorder %s22, 0
      %s25 = sadd.s32 %s24, 1
      %s26 = scalar_select %p23, %s24, %s25
      %p29 = pneg %p23
      %p30 = scmp.eq.s32.totalorder %s14, 1
      %p31 = por %p29, %p30
      %p32 = scmp.ne.s32.totalorder %s24, %s27
      %p33 = scmp.eq.s32.totalorder %s14, 0
      %p34 = por %p32, %p33
      %p35 = scmp.ne.s32.totalorder %s24, %s27
      %p36 = scmp.eq.s32.totalorder %s19, 1
      %p37 = por %p35, %p36
      %p38 = scmp.ne.s32.totalorder %s27, %s28
      %p39 = scmp.eq.s32.totalorder %s19, 0
      %p40 = por %p38, %p39
      %p41 = scmp.ne.s32.totalorder %s27, %s28
      %p42 = scmp.eq.s32.totalorder %s20, 1
      %p43 = por %p41, %p42
      %p45 = scmp.ne.s32.totalorder %s28, %s44
      %p46 = scmp.eq.s32.totalorder %s20, 0
      %p47 = por %p45, %p46
      %s49 = sadd.s32 %s48, 1
      %p52 = scmp.eq.s32.totalorder %s14, 1
      %p53 = scmp.ne.s32.totalorder %s48, %s50
      %p54 = scmp.eq.s32.totalorder %s14, 0
      %p55 = por %p53, %p54
      %p56 = scmp.ne.s32.totalorder %s48, %s50
      %p57 = scmp.eq.s32.totalorder %s19, 1
      %p58 = por %p56, %p57
      %p59 = scmp.ne.s32.totalorder %s50, %s51
      %p60 = scmp.eq.s32.totalorder %s19, 0
      %p61 = por %p59, %p60
      %p62 = scmp.ne.s32.totalorder %s50, %s51
      %p63 = scmp.eq.s32.totalorder %s20, 1
      %p64 = por %p62, %p63
      %p66 = scmp.ne.s32.totalorder %s51, %s65
      %p67 = scmp.eq.s32.totalorder %s20, 0
      %p68 = por %p66, %p67
      %s70 = sadd.s32 %s69, 1
      %p73 = scmp.eq.s32.totalorder %s14, 1
      %p74 = scmp.ne.s32.totalorder %s69, %s71
      %p75 = scmp.eq.s32.totalorder %s14, 0
      %p76 = por %p74, %p75
      %p77 = scmp.ne.s32.totalorder %s69, %s71
      %p78 = scmp.eq.s32.totalorder %s19, 1
      %p79 = por %p77, %p78
      %p80 = scmp.ne.s32.totalorder %s71, %s72
      %p81 = scmp.eq.s32.totalorder %s19, 0
      %p82 = por %p80, %p81
      %p83 = scmp.ne.s32.totalorder %s71, %s72
      %p84 = scmp.eq.s32.totalorder %s20, 1
      %p85 = por %p83, %p84
      %p87 = scmp.ne.s32.totalorder %s72, %s86
      %p88 = scmp.eq.s32.totalorder %s20, 0
      %p89 = por %p87, %p88
      %s91 = sadd.s32 %s90, 1
      %p94 = scmp.eq.s32.totalorder %s14, 1
      %p95 = scmp.ne.s32.totalorder %s90, %s92
      %p96 = scmp.eq.s32.totalorder %s14, 0
      %p97 = por %p95, %p96
      %p98 = scmp.ne.s32.totalorder %s90, %s92
      %p99 = scmp.eq.s32.totalorder %s19, 1
      %p100 = por %p98, %p99
      %p101 = scmp.ne.s32.totalorder %s92, %s93
      %p102 = scmp.eq.s32.totalorder %s19, 0
      %p103 = por %p101, %p102
      %p104 = scmp.ne.s32.totalorder %s92, %s93
      %p105 = scmp.eq.s32.totalorder %s20, 1
      %p106 = por %p104, %p105
      %p108 = scmp.ne.s32.totalorder %s93, %s107
      %p109 = scmp.eq.s32.totalorder %s20, 0
      %p110 = por %p108, %p109
      %s112 = sadd.s32 %s111, 1
      %p115 = scmp.eq.s32.totalorder %s14, 1
      %p116 = scmp.ne.s32.totalorder %s111, %s113
      %p117 = scmp.eq.s32.totalorder %s14, 0
      %p118 = por %p116, %p117
      %p119 = scmp.ne.s32.totalorder %s111, %s113
      %p120 = scmp.eq.s32.totalorder %s19, 1
      %p121 = por %p119, %p120
      %p122 = scmp.ne.s32.totalorder %s113, %s114
      %p123 = scmp.eq.s32.totalorder %s19, 0
      %p124 = por %p122, %p123
      %p125 = scmp.ne.s32.totalorder %s113, %s114
      %p126 = scmp.eq.s32.totalorder %s20, 1
      %p127 = por %p125, %p126
      %p129 = scmp.ne.s32.totalorder %s114, %s128
      %p130 = scmp.eq.s32.totalorder %s20, 0
      %p131 = por %p129, %p130
      %s132 = ssub.s32 %s14, %s21
      %p133 = scmp.eq.s32.totalorder %s132, 0
      %s135 = sadd.s32 %s134, 1
      %s136 = scalar_select %p133, %s134, %s135
      %p139 = pneg %p133
      %p140 = scmp.eq.s32.totalorder %s14, 1
      %p141 = por %p139, %p140
      %p142 = scmp.ne.s32.totalorder %s134, %s137
      %p143 = scmp.eq.s32.totalorder %s14, 0
      %p144 = por %p142, %p143
      %p145 = scmp.ne.s32.totalorder %s134, %s137
      %p146 = scmp.eq.s32.totalorder %s19, 1
      %p147 = por %p145, %p146
      %p148 = scmp.ne.s32.totalorder %s137, %s138
      %p149 = scmp.eq.s32.totalorder %s19, 0
      %p150 = por %p148, %p149
      %p151 = scmp.ne.s32.totalorder %s137, %s138
      %p152 = scmp.eq.s32.totalorder %s20, 1
      %p153 = por %p151, %p152
      %p155 = scmp.ne.s32.totalorder %s138, %s154
      %p156 = scmp.eq.s32.totalorder %s20, 0
      %p157 = por %p155, %p156
      %p158 = scmp.le.s32.totalorder 1, %s14
      %p159 = scmp.lt.s32.totalorder %s14, 3
      %p160 = pnand %p158, %p159
      %p161 = pneg %p160
      // Predicated region
      $region9: #{tpu_custom_call.1} parent=5 // pred_check
        _
      $region10: #{tpu_custom_call.1} parent=5 // pred_check_branch
        %163 = sbr.rel (%p160) target = $region12
      $region11: #{tpu_custom_call.1} parent=5 // pred_region
        %s164 = ssub.s32 %s14, 1
        // Predicated region
        $region13: #{tpu_custom_call.1} parent=11 // pred_check
          %p165 = pneg %p61
        $region14: #{tpu_custom_call.1} parent=11 // pred_check_branch
          %167 = sbr.rel (%p165) target = $region16
        $region15: #{tpu_custom_call.1} parent=11 // pred_region
          _
        $region16: #{tpu_custom_call.1} parent=11 // pred_fallthru
          _
        // Predicated region
        $region17: #{tpu_custom_call.1} parent=11 // pred_check
          %p168 = pneg %p82
        $region18: #{tpu_custom_call.1} parent=11 // pred_check_branch
          %170 = sbr.rel (%p168) target = $region20
        $region19: #{tpu_custom_call.1} parent=11 // pred_region
          _
        $region20: #{tpu_custom_call.1} parent=11 // pred_fallthru
          _
        // Predicated region
        $region21: #{tpu_custom_call.1} parent=11 // pred_check
          %p171 = pneg %p103
        $region22: #{tpu_custom_call.1} parent=11 // pred_check_branch
          %173 = sbr.rel (%p171) target = $region24
        $region23: #{tpu_custom_call.1} parent=11 // pred_region
          _
        $region24: #{tpu_custom_call.1} parent=11 // pred_fallthru
          _
        // Predicated region
        $region25: #{tpu_custom_call.1} parent=11 // pred_check
          %p174 = pneg %p124
        $region26: #{tpu_custom_call.1} parent=11 // pred_check_branch
          %176 = sbr.rel (%p174) target = $region28
        $region27: #{tpu_custom_call.1} parent=11 // pred_region
          _
        $region28: #{tpu_custom_call.1} parent=11 // pred_fallthru
          _
      $region12: #{tpu_custom_call.1} parent=5 // pred_fallthru
        _
      %p177 = scmp.lt.s32.totalorder %s14, 2
      // Predicated region
      $region29: #{tpu_custom_call.1} parent=5 // pred_check
        %p178 = pneg %p177
      $region30: #{tpu_custom_call.1} parent=5 // pred_check_branch
        %180 = sbr.rel (%p178) target = $region32
      $region31: #{tpu_custom_call.1} parent=5 // pred_region
        // Predicated region
        $region33: #{tpu_custom_call.1} parent=31 // pred_check
          %p181 = pneg %p34
        $region34: #{tpu_custom_call.1} parent=31 // pred_check_branch
          %183 = sbr.rel (%p181) target = $region36
        $region35: #{tpu_custom_call.1} parent=31 // pred_region
          %s184 = smul.u32 16, %s14
          %p185 = scmp.lt.s32.totalorder %s184, 31
          %s186 = scalar_select %p185, %s184, 31
          %s187 = smul.addr %s186, 8
          %s188 = scalar_lea.vmem %s0, %s187
          %s189 = smul.u32 16, %s14
        $region36: #{tpu_custom_call.1} parent=31 // pred_fallthru
          _
      $region32: #{tpu_custom_call.1} parent=5 // pred_fallthru
        _
      %p190 = scmp.le.s32.totalorder 1, %s14
      %p191 = scmp.lt.s32.totalorder %s14, 3
      %p192 = pnand %p190, %p191
      %p193 = pneg %p192
      // Predicated region
      $region37: #{tpu_custom_call.1} parent=5 // pred_check
        _
      $region38: #{tpu_custom_call.1} parent=5 // pred_check_branch
        %195 = sbr.rel (%p192) target = $region40
      $region39: #{tpu_custom_call.1} parent=5 // pred_region
        %s196 = ssub.s32 %s14, 1
        %s197 = smul.u32 16, %s19
        %p198 = scmp.lt.s32.totalorder %s197, 31
        %s199 = scalar_select %p198, %s197, 31
        %s200 = smul.addr %s199, 8
        %s201 = scalar_lea.vmem %s0, %s200
        %p202 = pneg %p40
        %p203 = pneg %p37
        %p204 = pneg %p61
        %p205 = pneg %p58
        %p206 = pneg %p82
        %p207 = pneg %p79
        %p208 = pneg %p103
        %p209 = pneg %p100
        %p210 = pneg %p124
        %p211 = pneg %p121
        %p212 = pneg %p150
        %p213 = pneg %p147
        %s214 = sand.u32 %s137, 1
        %s215 = scalar_lea.sflag [#allocation3], %s214
        %s216 = sand.u32 %s137, 1
        %s217 = smul.addr %s216, 128
        %s218 = scalar_lea.vmem [#allocation2], %s217
        %s219 = smul.u32 16, %s19
        %p220 = scmp.lt.s32.totalorder %s219, 31
        %s221 = scalar_select %p220, %s219, 31
        %s222 = smul.addr %s221, 8
        %s223 = scalar_lea.vmem %s0, %s222
        %s224 = smul.u32 16, %s19
        %s225 = smul.u32 16, %s19
        %v226 = vld [vmem:[%s223] sm:$0xff]
        %v227 = vld [vmem:[%s223 + $0x8] sm:$0xff]
        %v228 = vld [vmem:[%s223 + $0x10] sm:$0xff]
        %v229 = vld [vmem:[%s223 + $0x18] sm:$0xff]
        %v230 = vld [vmem:[%s223 + $0x20] sm:$0xff]
        %v231 = vld [vmem:[%s223 + $0x28] sm:$0xff]
        %v232 = vld [vmem:[%s223 + $0x30] sm:$0xff]
        %v233 = vld [vmem:[%s223 + $0x38] sm:$0xff]
        %v234 = vld [vmem:[%s223 + $0x40] sm:$0xff]
        %v235 = vld [vmem:[%s223 + $0x48] sm:$0xff]
        %v236 = vld [vmem:[%s223 + $0x50] sm:$0xff]
        %v237 = vld [vmem:[%s223 + $0x58] sm:$0xff]
        %v238 = vld [vmem:[%s223 + $0x60] sm:$0xff]
        %v239 = vld [vmem:[%s223 + $0x68] sm:$0xff]
        %v240 = vld [vmem:[%s223 + $0x70] sm:$0xff]
        %v241 = vld [vmem:[%s223 + $0x78] sm:$0xff]
        %v242 = vld [vmem:[%s1] sm:$0xff]
        %v243 = vld [vmem:[%s1 + $0x8] sm:$0xff]
        %v244 = vld [vmem:[%s2] sm:$0x1]
        %v246 = vlaneseq
        %v247 = vshrl.u32 %v246, 7
        %v248 = vsub.s32 0, %v247
        %v249 = vrot.slane %v244, %v248
        %vm251 = vcmask 130048
        %v253 = vsel %vm251, %v226, 0
        %v256 = vsel %vm251, %v227, 0
        %v259 = vsel %vm251, %v228, 0
        %v262 = vsel %vm251, %v229, 0
        %v265 = vsel %vm251, %v230, 0
        %v268 = vsel %vm251, %v231, 0
        %v271 = vsel %vm251, %v232, 0
        %v274 = vsel %vm251, %v233, 0
        %v277 = vsel %vm251, %v234, 0
        %v280 = vsel %vm251, %v235, 0
        %v283 = vsel %vm251, %v236, 0
        %v286 = vsel %vm251, %v237, 0
        %v289 = vsel %vm251, %v238, 0
        %v292 = vsel %vm251, %v239, 0
        %v295 = vsel %vm251, %v240, 0
        %v298 = vsel %vm251, %v241, 0
        %300 = vmatprep.subr.mxu0 0.0
        %301 = vmatpush1.msra.mxu0 %v242
        %302 = vmatprep.subr.mxu0 0.0
        %303 = vmatpush1.msra.mxu0 %v243
        %304 = vmatprep.subr.mxu0 0.0
        %305 = vmatpush1.msra.mxu0 0.0
        %306 = vmatprep.subr.mxu0 0.0
        %307 = vmatpush1.msra.mxu0 0.0
        %308 = vmatprep.subr.mxu0 0.0
        %309 = vmatpush1.msra.mxu0 0.0
        %310 = vmatprep.subr.mxu0 0.0
        %311 = vmatpush1.msra.mxu0 0.0
        %312 = vmatprep.subr.mxu0 0.0
        %313 = vmatpush1.msra.mxu0 0.0
        %314 = vmatprep.subr.mxu0 0.0
        %315 = vmatpush1.msra.mxu0 0.0
        %316 = vmatprep.subr.mxu0 0.0
        %317 = vmatpush1.msra.mxu0 0.0
        %318 = vmatprep.subr.mxu0 0.0
        %319 = vmatpush1.msra.mxu0 0.0
        %320 = vmatprep.subr.mxu0 0.0
        %321 = vmatpush1.msra.mxu0 0.0
        %322 = vmatprep.subr.mxu0 0.0
        %323 = vmatpush1.msra.mxu0 0.0
        %324 = vmatprep.subr.mxu0 0.0
        %325 = vmatpush1.msra.mxu0 0.0
        %326 = vmatprep.subr.mxu0 0.0
        %327 = vmatpush1.msra.mxu0 0.0
        %328 = vmatprep.subr.mxu0 0.0
        %329 = vmatpush1.msra.mxu0 0.0
        %330 = vmatprep.subr.mxu0 0.0
        %331 = vmatpush1.msra.mxu0 0.0
        %332 = vmatprep.subr.mxu0 0.0
        %333 = vmatpush1.msra.mxu0 0.0
        %334 = vmatprep.subr.mxu0 0.0
        %335 = vmatpush1.msra.mxu0 0.0
        %336 = vmatprep.subr.mxu0 0.0
        %337 = vmatpush1.msra.mxu0 0.0
        %338 = vmatprep.subr.mxu0 0.0
        %339 = vmatpush1.msra.mxu0 0.0
        %340 = vmatprep.subr.mxu0 0.0
        %341 = vmatpush1.msra.mxu0 0.0
        %342 = vmatprep.subr.mxu0 0.0
        %343 = vmatpush1.msra.mxu0 0.0
        %344 = vmatprep.subr.mxu0 0.0
        %345 = vmatpush1.msra.mxu0 0.0
        %346 = vmatprep.subr.mxu0 0.0
        %347 = vmatpush1.msra.mxu0 0.0
        %348 = vmatprep.subr.mxu0 0.0
        %349 = vmatpush1.msra.mxu0 0.0
        %350 = vmatprep.subr.mxu0 0.0
        %351 = vmatpush1.msra.mxu0 0.0
        %352 = vmatprep.subr.mxu0 0.0
        %353 = vmatpush1.msra.mxu0 0.0
        %354 = vmatprep.subr.mxu0 0.0
        %355 = vmatpush1.msra.mxu0 0.0
        %356 = vmatprep.subr.mxu0 0.0
        %357 = vmatpush1.msra.mxu0 0.0
        %358 = vmatprep.subr.mxu0 0.0
        %359 = vmatpush1.msra.mxu0 0.0
        %360 = vmatprep.subr.mxu0 0.0
        %361 = vmatpush1.msra.mxu0 0.0
        %362 = vmatprep.subr.mxu0 0.0
        %363 = vmatpush1.msra.mxu0 0.0
        %364 = vmatprep.mubr.f32.mxu0 0.0
        %365 = vmatmul.mubr.f32.gmra.mrb[0].mxu0 %v253
        %v366 = vpop.f32.mrb[0].mxu0
        %v367 = vadd.f32 %v249, %v366
        %v368 = vpop.f32.mrb[0].mxu0
        %369 = vmatprep.mubr.f32.mxu0 0.0
        %370 = vmatmul.mubr.f32.gmra.mrb[0].mxu0 %v256
        %v371 = vpop.f32.mrb[0].mxu0
        %v372 = vadd.f32 %v249, %v371
        %v373 = vpop.f32.mrb[0].mxu0
        %374 = vmatprep.mubr.f32.mxu0 0.0
        %375 = vmatmul.mubr.f32.gmra.mrb[0].mxu0 %v259
        %v376 = vpop.f32.mrb[0].mxu0
        %v377 = vadd.f32 %v249, %v376
        %v378 = vpop.f32.mrb[0].mxu0
        %379 = vmatprep.mubr.f32.mxu0 0.0
        %380 = vmatmul.mubr.f32.gmra.mrb[0].mxu0 %v262
        %v381 = vpop.f32.mrb[0].mxu0
        %v382 = vadd.f32 %v249, %v381
        %v383 = vpop.f32.mrb[0].mxu0
        %384 = vmatprep.mubr.f32.mxu0 0.0
        %385 = vmatmul.mubr.f32.gmra.mrb[0].mxu0 %v265
        %v386 = vpop.f32.mrb[0].mxu0
        %v387 = vadd.f32 %v249, %v386
        %v388 = vpop.f32.mrb[0].mxu0
        %389 = vmatprep.mubr.f32.mxu0 0.0
        %390 = vmatmul.mubr.f32.gmra.mrb[0].mxu0 %v268
        %v391 = vpop.f32.mrb[0].mxu0
        %v392 = vadd.f32 %v249, %v391
        %v393 = vpop.f32.mrb[0].mxu0
        %394 = vmatprep.mubr.f32.mxu0 0.0
        %395 = vmatmul.mubr.f32.gmra.mrb[0].mxu0 %v271
        %v396 = vpop.f32.mrb[0].mxu0
        %v397 = vadd.f32 %v249, %v396
        %v398 = vpop.f32.mrb[0].mxu0
        %399 = vmatprep.mubr.f32.mxu0 0.0
        %400 = vmatmul.mubr.f32.gmra.mrb[0].mxu0 %v274
        %v401 = vpop.f32.mrb[0].mxu0
        %v402 = vadd.f32 %v249, %v401
        %v403 = vpop.f32.mrb[0].mxu0
        %404 = vmatprep.mubr.f32.mxu0 0.0
        %405 = vmatmul.mubr.f32.gmra.mrb[0].mxu0 %v277
        %v406 = vpop.f32.mrb[0].mxu0
        %v407 = vadd.f32 %v249, %v406
        %v408 = vpop.f32.mrb[0].mxu0
        %409 = vmatprep.mubr.f32.mxu0 0.0
        %410 = vmatmul.mubr.f32.gmra.mrb[0].mxu0 %v280
        %v411 = vpop.f32.mrb[0].mxu0
        %v412 = vadd.f32 %v249, %v411
        %v413 = vpop.f32.mrb[0].mxu0
        %414 = vmatprep.mubr.f32.mxu0 0.0
        %415 = vmatmul.mubr.f32.gmra.mrb[0].mxu0 %v283
        %v416 = vpop.f32.mrb[0].mxu0
        %v417 = vadd.f32 %v249, %v416
        %v418 = vpop.f32.mrb[0].mxu0
        %419 = vmatprep.mubr.f32.mxu0 0.0
        %420 = vmatmul.mubr.f32.gmra.mrb[0].mxu0 %v286
        %v421 = vpop.f32.mrb[0].mxu0
        %v422 = vadd.f32 %v249, %v421
        %v423 = vpop.f32.mrb[0].mxu0
        %424 = vmatprep.mubr.f32.mxu0 0.0
        %425 = vmatmul.mubr.f32.gmra.mrb[0].mxu0 %v289
        %v426 = vpop.f32.mrb[0].mxu0
        %v427 = vadd.f32 %v249, %v426
        %v428 = vpop.f32.mrb[0].mxu0
        %429 = vmatprep.mubr.f32.mxu0 0.0
        %430 = vmatmul.mubr.f32.gmra.mrb[0].mxu0 %v292
        %v431 = vpop.f32.mrb[0].mxu0
        %v432 = vadd.f32 %v249, %v431
        %v433 = vpop.f32.mrb[0].mxu0
        %434 = vmatprep.mubr.f32.mxu0 0.0
        %435 = vmatmul.mubr.f32.gmra.mrb[0].mxu0 %v295
        %v436 = vpop.f32.mrb[0].mxu0
        %v437 = vadd.f32 %v249, %v436
        %v438 = vpop.f32.mrb[0].mxu0
        %439 = vmatprep.mubr.f32.mxu0 0.0
        %440 = vmatmul.mubr.f32.gmra.mrb[0].mxu0 %v298
        %v441 = vpop.f32.mrb[0].mxu0
        %v442 = vadd.f32 %v249, %v441
        %v443 = vpop.f32.mrb[0].mxu0
        %444 = vdwg.mxu0
        %v445 = vmax.f32 %v367, 0.0
        %v446 = vmax.f32 %v372, 0.0
        %v447 = vmax.f32 %v377, 0.0
        %v448 = vmax.f32 %v382, 0.0
        %v449 = vmax.f32 %v387, 0.0
        %v450 = vmax.f32 %v392, 0.0
        %v451 = vmax.f32 %v397, 0.0
        %v452 = vmax.f32 %v402, 0.0
        %v453 = vmax.f32 %v407, 0.0
        %v454 = vmax.f32 %v412, 0.0
        %v455 = vmax.f32 %v417, 0.0
        %v456 = vmax.f32 %v422, 0.0
        %v457 = vmax.f32 %v427, 0.0
        %v458 = vmax.f32 %v432, 0.0
        %v459 = vmax.f32 %v437, 0.0
        %v460 = vmax.f32 %v442, 0.0
        %v461 = vld [vmem:[%s3] sm:$0xff]
        %v462 = vld [vmem:[%s3 + $0x8] sm:$0xff]
        %v463 = vld [vmem:[%s3 + $0x10] sm:$0xff]
        %v464 = vld [vmem:[%s3 + $0x18] sm:$0xff]
        %v465 = vld [vmem:[%s3 + $0x20] sm:$0xff]
        %v466 = vld [vmem:[%s3 + $0x28] sm:$0xff]
        %v467 = vld [vmem:[%s3 + $0x30] sm:$0xff]
        %v468 = vld [vmem:[%s3 + $0x38] sm:$0xff]
        %v469 = vld [vmem:[%s3 + $0x40] sm:$0xff]
        %v470 = vld [vmem:[%s3 + $0x48] sm:$0xff]
        %v471 = vld [vmem:[%s3 + $0x50] sm:$0xff]
        %v472 = vld [vmem:[%s3 + $0x58] sm:$0xff]
        %v473 = vld [vmem:[%s3 + $0x60] sm:$0xff]
        %v474 = vld [vmem:[%s3 + $0x68] sm:$0xff]
        %v475 = vld [vmem:[%s3 + $0x70] sm:$0xff]
        %v476 = vld [vmem:[%s3 + $0x78] sm:$0xff]
        %v477 = vld [vmem:[%s4] sm:$0x1]
        %v479 = vlaneseq
        %v480 = vshrl.u32 %v479, 7
        %v481 = vsub.s32 0, %v480
        %v482 = vrot.slane %v477, %v481
        %484 = vmatprep.subr.mxu0 0.0
        %485 = vmatpush1.msra.mxu0 %v461
        %486 = vmatprep.subr.mxu0 0.0
        %487 = vmatpush1.msra.mxu0 %v462
        %488 = vmatprep.subr.mxu0 0.0
        %489 = vmatpush1.msra.mxu0 %v463
        %490 = vmatprep.subr.mxu0 0.0
        %491 = vmatpush1.msra.mxu0 %v464
        %492 = vmatprep.subr.mxu0 0.0
        %493 = vmatpush1.msra.mxu0 %v465
        %494 = vmatprep.subr.mxu0 0.0
        %495 = vmatpush1.msra.mxu0 %v466
        %496 = vmatprep.subr.mxu0 0.0
        %497 = vmatpush1.msra.mxu0 %v467
        %498 = vmatprep.subr.mxu0 0.0
        %499 = vmatpush1.msra.mxu0 %v468
        %500 = vmatprep.subr.mxu0 0.0
        %501 = vmatpush1.msra.mxu0 %v469
        %502 = vmatprep.subr.mxu0 0.0
        %503 = vmatpush1.msra.mxu0 %v470
        %504 = vmatprep.subr.mxu0 0.0
        %505 = vmatpush1.msra.mxu0 %v471
        %506 = vmatprep.subr.mxu0 0.0
        %507 = vmatpush1.msra.mxu0 %v472
        %508 = vmatprep.subr.mxu0 0.0
        %509 = vmatpush1.msra.mxu0 %v473
        %510 = vmatprep.subr.mxu0 0.0
        %511 = vmatpush1.msra.mxu0 %v474
        %512 = vmatprep.subr.mxu0 0.0
        %513 = vmatpush1.msra.mxu0 %v475
        %514 = vmatprep.subr.mxu0 0.0
        %515 = vmatpush1.msra.mxu0 %v476
        %516 = vmatprep.subr.mxu0 0.0
        %517 = vmatpush1.msra.mxu0 0.0
        %518 = vmatprep.subr.mxu0 0.0
        %519 = vmatpush1.msra.mxu0 0.0
        %520 = vmatprep.subr.mxu0 0.0
        %521 = vmatpush1.msra.mxu0 0.0
        %522 = vmatprep.subr.mxu0 0.0
        %523 = vmatpush1.msra.mxu0 0.0
        %524 = vmatprep.subr.mxu0 0.0
        %525 = vmatpush1.msra.mxu0 0.0
        %526 = vmatprep.subr.mxu0 0.0
        %527 = vmatpush1.msra.mxu0 0.0
        %528 = vmatprep.subr.mxu0 0.0
        %529 = vmatpush1.msra.mxu0 0.0
        %530 = vmatprep.subr.mxu0 0.0
        %531 = vmatpush1.msra.mxu0 0.0
        %532 = vmatprep.subr.mxu0 0.0
        %533 = vmatpush1.msra.mxu0 0.0
        %534 = vmatprep.subr.mxu0 0.0
        %535 = vmatpush1.msra.mxu0 0.0
        %536 = vmatprep.subr.mxu0 0.0
        %537 = vmatpush1.msra.mxu0 0.0
        %538 = vmatprep.subr.mxu0 0.0
        %539 = vmatpush1.msra.mxu0 0.0
        %540 = vmatprep.subr.mxu0 0.0
        %541 = vmatpush1.msra.mxu0 0.0
        %542 = vmatprep.subr.mxu0 0.0
        %543 = vmatpush1.msra.mxu0 0.0
        %544 = vmatprep.subr.mxu0 0.0
        %545 = vmatpush1.msra.mxu0 0.0
        %546 = vmatprep.subr.mxu0 0.0
        %547 = vmatpush1.msra.mxu0 0.0
        %548 = vmatprep.mubr.f32.mxu0 0.0
        %549 = vmatmul.mubr.f32.gmra.mrb[0].mxu0 %v445
        %v550 = vpop.f32.mrb[0].mxu0
        %v551 = vadd.f32 %v482, %v550
        %v552 = vpop.f32.mrb[0].mxu0
        %553 = vmatprep.mubr.f32.mxu0 0.0
        %554 = vmatmul.mubr.f32.gmra.mrb[0].mxu0 %v446
        %v555 = vpop.f32.mrb[0].mxu0
        %v556 = vadd.f32 %v482, %v555
        %v557 = vpop.f32.mrb[0].mxu0
        %558 = vmatprep.mubr.f32.mxu0 0.0
        %559 = vmatmul.mubr.f32.gmra.mrb[0].mxu0 %v447
        %v560 = vpop.f32.mrb[0].mxu0
        %v561 = vadd.f32 %v482, %v560
        %v562 = vpop.f32.mrb[0].mxu0
        %563 = vmatprep.mubr.f32.mxu0 0.0
        %564 = vmatmul.mubr.f32.gmra.mrb[0].mxu0 %v448
        %v565 = vpop.f32.mrb[0].mxu0
        %v566 = vadd.f32 %v482, %v565
        %v567 = vpop.f32.mrb[0].mxu0
        %568 = vmatprep.mubr.f32.mxu0 0.0
        %569 = vmatmul.mubr.f32.gmra.mrb[0].mxu0 %v449
        %v570 = vpop.f32.mrb[0].mxu0
        %v571 = vadd.f32 %v482, %v570
        %v572 = vpop.f32.mrb[0].mxu0
        %573 = vmatprep.mubr.f32.mxu0 0.0
        %574 = vmatmul.mubr.f32.gmra.mrb[0].mxu0 %v450
        %v575 = vpop.f32.mrb[0].mxu0
        %v576 = vadd.f32 %v482, %v575
        %v577 = vpop.f32.mrb[0].mxu0
        %578 = vmatprep.mubr.f32.mxu0 0.0
        %579 = vmatmul.mubr.f32.gmra.mrb[0].mxu0 %v451
        %v580 = vpop.f32.mrb[0].mxu0
        %v581 = vadd.f32 %v482, %v580
        %v582 = vpop.f32.mrb[0].mxu0
        %583 = vmatprep.mubr.f32.mxu0 0.0
        %584 = vmatmul.mubr.f32.gmra.mrb[0].mxu0 %v452
        %v585 = vpop.f32.mrb[0].mxu0
        %v586 = vadd.f32 %v482, %v585
        %v587 = vpop.f32.mrb[0].mxu0
        %588 = vmatprep.mubr.f32.mxu0 0.0
        %589 = vmatmul.mubr.f32.gmra.mrb[0].mxu0 %v453
        %v590 = vpop.f32.mrb[0].mxu0
        %v591 = vadd.f32 %v482, %v590
        %v592 = vpop.f32.mrb[0].mxu0
        %593 = vmatprep.mubr.f32.mxu0 0.0
        %594 = vmatmul.mubr.f32.gmra.mrb[0].mxu0 %v454
        %v595 = vpop.f32.mrb[0].mxu0
        %v596 = vadd.f32 %v482, %v595
        %v597 = vpop.f32.mrb[0].mxu0
        %598 = vmatprep.mubr.f32.mxu0 0.0
        %599 = vmatmul.mubr.f32.gmra.mrb[0].mxu0 %v455
        %v600 = vpop.f32.mrb[0].mxu0
        %v601 = vadd.f32 %v482, %v600
        %v602 = vpop.f32.mrb[0].mxu0
        %603 = vmatprep.mubr.f32.mxu0 0.0
        %604 = vmatmul.mubr.f32.gmra.mrb[0].mxu0 %v456
        %v605 = vpop.f32.mrb[0].mxu0
        %v606 = vadd.f32 %v482, %v605
        %v607 = vpop.f32.mrb[0].mxu0
        %608 = vmatprep.mubr.f32.mxu0 0.0
        %609 = vmatmul.mubr.f32.gmra.mrb[0].mxu0 %v457
        %v610 = vpop.f32.mrb[0].mxu0
        %v611 = vadd.f32 %v482, %v610
        %v612 = vpop.f32.mrb[0].mxu0
        %613 = vmatprep.mubr.f32.mxu0 0.0
        %614 = vmatmul.mubr.f32.gmra.mrb[0].mxu0 %v458
        %v615 = vpop.f32.mrb[0].mxu0
        %v616 = vadd.f32 %v482, %v615
        %v617 = vpop.f32.mrb[0].mxu0
        %618 = vmatprep.mubr.f32.mxu0 0.0
        %619 = vmatmul.mubr.f32.gmra.mrb[0].mxu0 %v459
        %v620 = vpop.f32.mrb[0].mxu0
        %v621 = vadd.f32 %v482, %v620
        %v622 = vpop.f32.mrb[0].mxu0
        %623 = vmatprep.mubr.f32.mxu0 0.0
        %624 = vmatmul.mubr.f32.gmra.mrb[0].mxu0 %v460
        %v625 = vpop.f32.mrb[0].mxu0
        %v626 = vadd.f32 %v482, %v625
        %v627 = vpop.f32.mrb[0].mxu0
        %628 = vdwg.mxu0
        %629 = vmax.xlane.f32.xlu0 %v551
        %v630 = vpop.xlane.xlu0 %629
        %631 = vmax.xlane.f32.xlu0 %v556
        %v632 = vpop.xlane.xlu0 %631
        %633 = vmax.xlane.f32.xlu0 %v561
        %v634 = vpop.xlane.xlu0 %633
        %635 = vmax.xlane.f32.xlu0 %v566
        %v636 = vpop.xlane.xlu0 %635
        %637 = vmax.xlane.f32.xlu0 %v571
        %v638 = vpop.xlane.xlu0 %637
        %639 = vmax.xlane.f32.xlu0 %v576
        %v640 = vpop.xlane.xlu0 %639
        %641 = vmax.xlane.f32.xlu0 %v581
        %v642 = vpop.xlane.xlu0 %641
        %643 = vmax.xlane.f32.xlu0 %v586
        %v644 = vpop.xlane.xlu0 %643
        %645 = vmax.xlane.f32.xlu0 %v591
        %v646 = vpop.xlane.xlu0 %645
        %647 = vmax.xlane.f32.xlu0 %v596
        %v648 = vpop.xlane.xlu0 %647
        %649 = vmax.xlane.f32.xlu0 %v601
        %v650 = vpop.xlane.xlu0 %649
        %651 = vmax.xlane.f32.xlu0 %v606
        %v652 = vpop.xlane.xlu0 %651
        %653 = vmax.xlane.f32.xlu0 %v611
        %v654 = vpop.xlane.xlu0 %653
        %655 = vmax.xlane.f32.xlu0 %v616
        %v656 = vpop.xlane.xlu0 %655
        %657 = vmax.xlane.f32.xlu0 %v621
        %v658 = vpop.xlane.xlu0 %657
        %659 = vmax.xlane.f32.xlu0 %v626
        %v660 = vpop.xlane.xlu0 %659
        %v661 = vsub.f32 %v551, %v630
        %v662 = vsub.f32 %v556, %v632
        %v663 = vsub.f32 %v561, %v634
        %v664 = vsub.f32 %v566, %v636
        %v665 = vsub.f32 %v571, %v638
        %v666 = vsub.f32 %v576, %v640
        %v667 = vsub.f32 %v581, %v642
        %v668 = vsub.f32 %v586, %v644
        %v669 = vsub.f32 %v591, %v646
        %v670 = vsub.f32 %v596, %v648
        %v671 = vsub.f32 %v601, %v650
        %v672 = vsub.f32 %v606, %v652
        %v673 = vsub.f32 %v611, %v654
        %v674 = vsub.f32 %v616, %v656
        %v675 = vsub.f32 %v621, %v658
        %v676 = vsub.f32 %v626, %v660
        %v677 = vmul.f32 %v661, 1.442695
        %v678 = vpow.pop %v677
        %v679 = vmul.f32 %v662, 1.442695
        %v680 = vpow.pop %v679
        %v681 = vmul.f32 %v663, 1.442695
        %v682 = vpow.pop %v681
        %v683 = vmul.f32 %v664, 1.442695
        %v684 = vpow.pop %v683
        %v685 = vmul.f32 %v665, 1.442695
        %v686 = vpow.pop %v685
        %v687 = vmul.f32 %v666, 1.442695
        %v688 = vpow.pop %v687
        %v689 = vmul.f32 %v667, 1.442695
        %v690 = vpow.pop %v689
        %v691 = vmul.f32 %v668, 1.442695
        %v692 = vpow.pop %v691
        %v693 = vmul.f32 %v669, 1.442695
        %v694 = vpow.pop %v693
        %v695 = vmul.f32 %v670, 1.442695
        %v696 = vpow.pop %v695
        %v697 = vmul.f32 %v671, 1.442695
        %v698 = vpow.pop %v697
        %v699 = vmul.f32 %v672, 1.442695
        %v700 = vpow.pop %v699
        %v701 = vmul.f32 %v673, 1.442695
        %v702 = vpow.pop %v701
        %v703 = vmul.f32 %v674, 1.442695
        %v704 = vpow.pop %v703
        %v705 = vmul.f32 %v675, 1.442695
        %v706 = vpow.pop %v705
        %v707 = vmul.f32 %v676, 1.442695
        %v708 = vpow.pop %v707
        %709 = vadd.xlane.f32.xlu0 %v678
        %v710 = vpop.xlane.xlu0 %709
        %711 = vadd.xlane.f32.xlu0 %v680
        %v712 = vpop.xlane.xlu0 %711
        %713 = vadd.xlane.f32.xlu0 %v682
        %v714 = vpop.xlane.xlu0 %713
        %715 = vadd.xlane.f32.xlu0 %v684
        %v716 = vpop.xlane.xlu0 %715
        %717 = vadd.xlane.f32.xlu0 %v686
        %v718 = vpop.xlane.xlu0 %717
        %719 = vadd.xlane.f32.xlu0 %v688
        %v720 = vpop.xlane.xlu0 %719
        %721 = vadd.xlane.f32.xlu0 %v690
        %v722 = vpop.xlane.xlu0 %721
        %723 = vadd.xlane.f32.xlu0 %v692
        %v724 = vpop.xlane.xlu0 %723
        %725 = vadd.xlane.f32.xlu0 %v694
        %v726 = vpop.xlane.xlu0 %725
        %727 = vadd.xlane.f32.xlu0 %v696
        %v728 = vpop.xlane.xlu0 %727
        %729 = vadd.xlane.f32.xlu0 %v698
        %v730 = vpop.xlane.xlu0 %729
        %731 = vadd.xlane.f32.xlu0 %v700
        %v732 = vpop.xlane.xlu0 %731
        %733 = vadd.xlane.f32.xlu0 %v702
        %v734 = vpop.xlane.xlu0 %733
        %735 = vadd.xlane.f32.xlu0 %v704
        %v736 = vpop.xlane.xlu0 %735
        %737 = vadd.xlane.f32.xlu0 %v706
        %v738 = vpop.xlane.xlu0 %737
        %739 = vadd.xlane.f32.xlu0 %v708
        %v740 = vpop.xlane.xlu0 %739
        %v741 = vrcp.pop %v710
        %v742 = vrcp.pop %v712
        %v743 = vrcp.pop %v714
        %v744 = vrcp.pop %v716
        %v745 = vrcp.pop %v718
        %v746 = vrcp.pop %v720
        %v747 = vrcp.pop %v722
        %v748 = vrcp.pop %v724
        %v749 = vrcp.pop %v726
        %v750 = vrcp.pop %v728
        %v751 = vrcp.pop %v730
        %v752 = vrcp.pop %v732
        %v753 = vrcp.pop %v734
        %v754 = vrcp.pop %v736
        %v755 = vrcp.pop %v738
        %v756 = vrcp.pop %v740
        %v757 = vmul.f32 %v710, %v741
        %v758 = vmul.f32 %v712, %v742
        %v759 = vmul.f32 %v714, %v743
        %v760 = vmul.f32 %v716, %v744
        %v761 = vmul.f32 %v718, %v745
        %v762 = vmul.f32 %v720, %v746
        %v763 = vmul.f32 %v722, %v747
        %v764 = vmul.f32 %v724, %v748
        %v765 = vmul.f32 %v726, %v749
        %v766 = vmul.f32 %v728, %v750
        %v767 = vmul.f32 %v730, %v751
        %v768 = vmul.f32 %v732, %v752
        %v769 = vmul.f32 %v734, %v753
        %v770 = vmul.f32 %v736, %v754
        %v771 = vmul.f32 %v738, %v755
        %v772 = vmul.f32 %v740, %v756
        %v773 = vsub.f32 2.0, %v757
        %v774 = vsub.f32 2.0, %v758
        %v775 = vsub.f32 2.0, %v759
        %v776 = vsub.f32 2.0, %v760
        %v777 = vsub.f32 2.0, %v761
        %v778 = vsub.f32 2.0, %v762
        %v779 = vsub.f32 2.0, %v763
        %v780 = vsub.f32 2.0, %v764
        %v781 = vsub.f32 2.0, %v765
        %v782 = vsub.f32 2.0, %v766
        %v783 = vsub.f32 2.0, %v767
        %v784 = vsub.f32 2.0, %v768
        %v785 = vsub.f32 2.0, %v769
        %v786 = vsub.f32 2.0, %v770
        %v787 = vsub.f32 2.0, %v771
        %v788 = vsub.f32 2.0, %v772
        %v789 = vmul.f32 %v741, %v773
        %v790 = vmul.f32 %v742, %v774
        %v791 = vmul.f32 %v743, %v775
        %v792 = vmul.f32 %v744, %v776
        %v793 = vmul.f32 %v745, %v777
        %v794 = vmul.f32 %v746, %v778
        %v795 = vmul.f32 %v747, %v779
        %v796 = vmul.f32 %v748, %v780
        %v797 = vmul.f32 %v749, %v781
        %v798 = vmul.f32 %v750, %v782
        %v799 = vmul.f32 %v751, %v783
        %v800 = vmul.f32 %v752, %v784
        %v801 = vmul.f32 %v753, %v785
        %v802 = vmul.f32 %v754, %v786
        %v803 = vmul.f32 %v755, %v787
        %v804 = vmul.f32 %v756, %v788
        %v805 = vmul.f32 %v678, %v789
        %v806 = vmul.f32 %v680, %v790
        %v807 = vmul.f32 %v682, %v791
        %v808 = vmul.f32 %v684, %v792
        %v809 = vmul.f32 %v686, %v793
        %v810 = vmul.f32 %v688, %v794
        %v811 = vmul.f32 %v690, %v795
        %v812 = vmul.f32 %v692, %v796
        %v813 = vmul.f32 %v694, %v797
        %v814 = vmul.f32 %v696, %v798
        %v815 = vmul.f32 %v698, %v799
        %v816 = vmul.f32 %v700, %v800
        %v817 = vmul.f32 %v702, %v801
        %v818 = vmul.f32 %v704, %v802
        %v819 = vmul.f32 %v706, %v803
        %v820 = vmul.f32 %v708, %v804
        %821 = vst [vmem:[%s218] sm:$0xff] %v805
        %822 = vst [vmem:[%s218 + $0x8] sm:$0xff] %v806
        %823 = vst [vmem:[%s218 + $0x10] sm:$0xff] %v807
        %824 = vst [vmem:[%s218 + $0x18] sm:$0xff] %v808
        %825 = vst [vmem:[%s218 + $0x20] sm:$0xff] %v809
        %826 = vst [vmem:[%s218 + $0x28] sm:$0xff] %v810
        %827 = vst [vmem:[%s218 + $0x30] sm:$0xff] %v811
        %828 = vst [vmem:[%s218 + $0x38] sm:$0xff] %v812
        %829 = vst [vmem:[%s218 + $0x40] sm:$0xff] %v813
        %830 = vst [vmem:[%s218 + $0x48] sm:$0xff] %v814
        %831 = vst [vmem:[%s218 + $0x50] sm:$0xff] %v815
        %832 = vst [vmem:[%s218 + $0x58] sm:$0xff] %v816
        %833 = vst [vmem:[%s218 + $0x60] sm:$0xff] %v817
        %834 = vst [vmem:[%s218 + $0x68] sm:$0xff] %v818
        %835 = vst [vmem:[%s218 + $0x70] sm:$0xff] %v819
        %836 = vst [vmem:[%s218 + $0x78] sm:$0xff] %v820
        %s837 = sand.u32 %s137, 1
        %s838 = scalar_lea.sflag [#allocation3], %s837
        %s839 = sand.u32 %s137, 1
        %s840 = smul.addr %s839, 128
        %s841 = scalar_lea.vmem [#allocation2], %s840
        // Predicated region
        $region41: #{tpu_custom_call.1} parent=39 // pred_check
          %p842 = pneg %p147
        $region42: #{tpu_custom_call.1} parent=39 // pred_check_branch
          %844 = sbr.rel (%p842) target = $region44
        $region43: #{tpu_custom_call.1} parent=39 // pred_region
          %s845 = smul.u32 16, %s19
          %s847 = ssub.s32 2048, 2048
          %848 = vsyncadd %s838, %s847
          %s849 = smul.addr %s845, 128
          %s850 = scalar_lea.hbm %s5, %s849
          %s851 = sshll.u32 %s841, 4
          %s852 = int_to_ptr.vmem [resolvable:$true] %s851
          %857 = dma.vmem_to_hbm [thread:$0]  %s852, 2048, %s850, %s838, 128, 128, 8
        $region44: #{tpu_custom_call.1} parent=39 // pred_fallthru
          _
      $region40: #{tpu_custom_call.1} parent=5 // pred_fallthru
        _
      %p858 = scmp.le.s32.totalorder 2, %s14
      // Predicated region
      $region45: #{tpu_custom_call.1} parent=5 // pred_check
        %p859 = pneg %p858
      $region46: #{tpu_custom_call.1} parent=5 // pred_check_branch
        %861 = sbr.rel (%p859) target = $region48
      $region47: #{tpu_custom_call.1} parent=5 // pred_region
        %s862 = ssub.s32 %s14, 2
        // Predicated region
        $region49: #{tpu_custom_call.1} parent=47 // pred_check
          %p863 = pneg %p153
        $region50: #{tpu_custom_call.1} parent=47 // pred_check_branch
          %865 = sbr.rel (%p863) target = $region52
        $region51: #{tpu_custom_call.1} parent=47 // pred_region
          %s866 = sand.u32 %s138, 1
          %s867 = scalar_lea.sflag [#allocation3], %s866
          %s868 = sand.u32 %s138, 1
          %s869 = smul.addr %s868, 128
          %s870 = scalar_lea.vmem [#allocation2], %s869
          %871 = dma.done %s867, 2048
        $region52: #{tpu_custom_call.1} parent=47 // pred_fallthru
          _
      $region48: #{tpu_custom_call.1} parent=5 // pred_fallthru
        _
    $region6: #{tpu_custom_call.1} parent=1 // loop_footer
      %s18 = sadd.s32 1, %s14
    $region7: #{tpu_custom_call.1} parent=1 // loop_footer_branch
      %13 = sbr.rel target = $region3
    $region8: #{tpu_custom_call.1} parent=1 // loop_exit
      _
    %872 = vsyncpa [#allocation3], 1
    %s873 = scalar_lea.sflag [#allocation3], 1
    %874 = vsyncpa %s873, 1

</llo_original>
